<compile_context>
chip_gen: v6e
topology: v6e:2x2x1
jax: 0.10.0
libtpu: 0.0.40
codegen_flags: <defaults>
</compile_context>

<pallas_src>
import jax
import jax.numpy as jnp
from jax.experimental import pallas as pl
from jax.experimental.pallas import tpu as pltpu

_LANE = 128


def mlp_kernel(x_ref, w1_ref, b1_ref, w2_ref, b2_ref, o_ref):
    # x arrives f32; cast to bf16 on the VPU (plenty of slack) for the MXU.
    x = x_ref[...].astype(jnp.bfloat16)
    # hidden = relu(x @ W1 + b1)   (bf16 operands -> f32 accumulate)
    h = jnp.dot(x, w1_ref[...], preferred_element_type=jnp.float32)
    h = jnp.maximum(h + b1_ref[...], 0.0)
    # out = h @ W2 + b2            (cast activation back to bf16 for the MXU)
    o = jnp.dot(h.astype(jnp.bfloat16), w2_ref[...],
                preferred_element_type=jnp.float32)
    o = o + b2_ref[...]
    # Store only the real logits (narrow last dim == full output array dim).
    n_out = o_ref.shape[1]
    o_ref[...] = o[:, :n_out].astype(o_ref.dtype)


def _round_up(n, m):
    return pl.cdiv(n, m) * m


def pack_params(w1, b1, w2, b2):
    """One-time packing of PyTorch-layout params.

    w1 : (n_hidden, n_feature)  ->  (n_feature, HP)  bf16, zero-padded cols
    b1 : (n_hidden,)            ->  (1, HP)          f32
    w2 : (n_output, n_hidden)   ->  (HP, OP)         bf16, zero-padded rows/cols
    b2 : (n_output,)            ->  (1, OP)          f32
    HP/OP = n_hidden/n_output rounded up to multiples of 128.  Zero padding is
    mathematically inert (padded hidden activations are exactly 0 before and
    after ReLU).
    """
    n_hidden, n_feature = w1.shape
    n_output = w2.shape[0]
    hp = _round_up(n_hidden, _LANE)
    op = _round_up(n_output, _LANE)

    w1p = jnp.zeros((n_feature, hp), jnp.bfloat16)
    w1p = w1p.at[:, :n_hidden].set(w1.T.astype(jnp.bfloat16))
    b1p = jnp.zeros((1, hp), jnp.float32).at[:, :n_hidden].set(b1.astype(jnp.float32))

    w2p = jnp.zeros((hp, op), jnp.bfloat16)
    w2p = w2p.at[:n_hidden, :n_output].set(w2.T.astype(jnp.bfloat16))
    b2p = jnp.zeros((1, op), jnp.float32).at[:, :n_output].set(b2.astype(jnp.float32))

    return w1p, b1p, w2p, b2p


def net_forward(x, w1p, b1p, w2p, b2p, n_output, max_tb=2048):
    """Pallas equivalent of Net.forward on packed params.

    x : (B, n_feature) float32 (cast to bf16 *inside* the kernel).
    Returns (B, n_output) float32 logits.
    """
    B, n_feature = x.shape
    hp = w1p.shape[1]
    op = w2p.shape[1]

    # Batch tile: multiple of 8 sublanes (f32 x input).  For B > 16 force at
    # least 2 tiles so the "parallel" axis can use both v7x TensorCores; cap
    # at max_tb so per-step overhead stays amortized without VMEM pressure.
    if B <= 16:
        tb = _round_up(B, 8)
    else:
        tb = min(max_tb, _round_up(pl.cdiv(B, 2), 8))

    b_pad = _round_up(B, tb)
    if b_pad != B:
        # Only materialized when B is not already tile-aligned (demo: no pad).
        x = jnp.pad(x, ((0, b_pad - B), (0, 0)))

    grid = (b_pad // tb,)

    flops = 2 * b_pad * (n_feature * hp + hp * op)
    bytes_accessed = (
        b_pad * n_feature * 4          # x read (f32)
        + w1p.size * 2 + w2p.size * 2  # bf16 weights
        + b1p.size * 4 + b2p.size * 4  # f32 biases
        + b_pad * n_output * 4         # narrow f32 logits writeback
    )

    out_padded = pl.pallas_call(
        mlp_kernel,
        out_shape=jax.ShapeDtypeStruct((b_pad, n_output), jnp.float32),
        grid=grid,
        in_specs=[
            pl.BlockSpec((tb, n_feature), lambda i: (i, 0)),   # x tile (f32)
            pl.BlockSpec((n_feature, hp), lambda i: (0, 0)),   # W1 resident
            pl.BlockSpec((1, hp), lambda i: (0, 0)),           # b1 resident
            pl.BlockSpec((hp, op), lambda i: (0, 0)),          # W2 resident
            pl.BlockSpec((1, op), lambda i: (0, 0)),           # b2 resident
        ],
        out_specs=pl.BlockSpec((tb, n_output), lambda i: (i, 0)),  # narrow logits
        compiler_params=pltpu.CompilerParams(
            dimension_semantics=("parallel",),
            vmem_limit_bytes=32 * 1024 * 1024,
        ),
        cost_estimate=pl.CostEstimate(
            flops=int(flops),
            transcendentals=0,
            bytes_accessed=int(bytes_accessed),
        ),
    )(x, w1p, b1p, w2p, b2p)

    # Padded batch rows compute relu(b1)@W2+b2 garbage; never expose them.
    return out_padded[:B]


def init_params(key, n_feature, n_hidden, n_output):
    """Deterministic init mimicking PyTorch Linear's U(-1/sqrt(fan_in), ...)."""
    k1, k2, k3, k4 = jax.random.split(key, 4)
    lim1 = 1.0 / jnp.sqrt(jnp.float32(n_feature))
    lim2 = 1.0 / jnp.sqrt(jnp.float32(n_hidden))
    w1 = jax.random.uniform(k1, (n_hidden, n_feature), jnp.float32, -lim1, lim1)
    b1 = jax.random.uniform(k2, (n_hidden,), jnp.float32, -lim1, lim1)
    w2 = jax.random.uniform(k3, (n_output, n_hidden), jnp.float32, -lim2, lim2)
    b2 = jax.random.uniform(k4, (n_output,), jnp.float32, -lim2, lim2)
    return w1, b1, w2, b2


if __name__ == "__main__":
    # Breast-cancer-ish sizes, kept small: 30 features -> 32 hidden -> 2 classes.
    B, n_feature, n_hidden, n_output = 8, 30, 32, 2

    key = jax.random.PRNGKey(0)
    kx, kp = jax.random.split(key)
    x = jax.random.normal(kx, (B, n_feature), jnp.float32)
    w1, b1, w2, b2 = init_params(kp, n_feature, n_hidden, n_output)

    # Pack once (transpose + pad + bf16 cast happen here, not per forward call).
    w1p, b1p, w2p, b2p = pack_params(w1, b1, w2, b2)

    out = net_forward(x, w1p, b1p, w2p, b2p, n_output)
    out = jax.block_until_ready(out)

    # Pure-JAX f32 reference of the same forward pass.  bf16 MXU operands are
    # an intentional accuracy trade-off => loose tolerance.
    ref = jnp.maximum(x @ w1.T + b1, 0.0) @ w2.T + b2
    assert out.shape == (B, n_output)
    assert jnp.allclose(out, ref, atol=5e-2, rtol=5e-2), (out, ref)

    print("KERNEL_OK")
</pallas_src>

<mosaic_0001>
module attributes {stable_mosaic.version = 11 : i64} {
  func.func @mlp_kernel(%arg0: i32, %arg1: memref<8x30xf32, #tpu.memory_space<vmem>>, %arg2: memref<30x128xbf16, #tpu.memory_space<vmem>>, %arg3: memref<1x128xf32, #tpu.memory_space<vmem>>, %arg4: memref<128x128xbf16, #tpu.memory_space<vmem>>, %arg5: memref<1x128xf32, #tpu.memory_space<vmem>>, %arg6: memref<8x2xf32, #tpu.memory_space<vmem>>) attributes {dimension_semantics = [#tpu.dimension_semantics<parallel>], iteration_bounds = array<i64: 1>, scalar_prefetch = 0 : i64, scratch_operands = 0 : i64, tpu.core_type = #tpu.core_type<tc>, window_params = [{transform_indices = @transform_0, window_bounds = array<i64: 8, 30>}, {pipeline_mode = #tpu.pipeline_mode<synchronous>, transform_indices = @transform_1, window_bounds = array<i64: 30, 128>}, {pipeline_mode = #tpu.pipeline_mode<synchronous>, transform_indices = @transform_2, window_bounds = array<i64: 1, 128>}, {pipeline_mode = #tpu.pipeline_mode<synchronous>, transform_indices = @transform_3, window_bounds = array<i64: 128, 128>}, {pipeline_mode = #tpu.pipeline_mode<synchronous>, transform_indices = @transform_4, window_bounds = array<i64: 1, 128>}, {transform_indices = @transform_5, window_bounds = array<i64: 8, 2>}]} {
    %c0 = arith.constant 0 : index
    %c0_0 = arith.constant 0 : index
    %0 = vector.load %arg1[%c0, %c0_0] : memref<8x30xf32, #tpu.memory_space<vmem>>, vector<8x30xf32>
    %1 = arith.truncf %0 : vector<8x30xf32> to vector<8x30xbf16>
    %c0_1 = arith.constant 0 : index
    %c0_2 = arith.constant 0 : index
    %2 = vector.load %arg2[%c0_1, %c0_2] : memref<30x128xbf16, #tpu.memory_space<vmem>>, vector<30x128xbf16>
    %cst = arith.constant dense<0.000000e+00> : vector<8x128xf32>
    %3 = tpu.matmul %1, %2, %cst {dimension_numbers = #tpu.dot_dimension_numbers<[1], [0], [0], [1], [0, 0, 1, 1], [], []>} : vector<8x30xbf16>, vector<30x128xbf16>, vector<8x128xf32> -> vector<8x128xf32>
    %c0_3 = arith.constant 0 : index
    %c0_4 = arith.constant 0 : index
    %4 = vector.load %arg3[%c0_3, %c0_4] : memref<1x128xf32, #tpu.memory_space<vmem>>, vector<1x128xf32>
    %5 = vector.broadcast %4 : vector<1x128xf32> to vector<8x128xf32>
    %6 = arith.addf %3, %5 : vector<8x128xf32>
    %cst_5 = arith.constant 0.000000e+00 : f32
    %7 = vector.broadcast %cst_5 : f32 to vector<8x128xf32>
    %8 = arith.maximumf %6, %7 : vector<8x128xf32>
    %9 = arith.truncf %8 : vector<8x128xf32> to vector<8x128xbf16>
    %c0_6 = arith.constant 0 : index
    %c0_7 = arith.constant 0 : index
    %10 = vector.load %arg4[%c0_6, %c0_7] : memref<128x128xbf16, #tpu.memory_space<vmem>>, vector<128x128xbf16>
    %cst_8 = arith.constant dense<0.000000e+00> : vector<8x128xf32>
    %11 = tpu.matmul %9, %10, %cst_8 {dimension_numbers = #tpu.dot_dimension_numbers<[1], [0], [0], [1], [0, 0, 1, 1], [], []>} : vector<8x128xbf16>, vector<128x128xbf16>, vector<8x128xf32> -> vector<8x128xf32>
    %c0_9 = arith.constant 0 : index
    %c0_10 = arith.constant 0 : index
    %12 = vector.load %arg5[%c0_9, %c0_10] : memref<1x128xf32, #tpu.memory_space<vmem>>, vector<1x128xf32>
    %13 = vector.broadcast %12 : vector<1x128xf32> to vector<8x128xf32>
    %14 = arith.addf %11, %13 : vector<8x128xf32>
    %15 = vector.extract_strided_slice %14 {offsets = [0, 0], sizes = [8, 2], strides = [1, 1]} : vector<8x128xf32> to vector<8x2xf32>
    %c0_11 = arith.constant 0 : index
    %c0_12 = arith.constant 0 : index
    %16 = vector.load %arg6[%c0_11, %c0_12] : memref<8x2xf32, #tpu.memory_space<vmem>>, vector<8x2xf32>
    tpu.vector_store %arg6[%c0_11, %c0_12], %15 {strides = array<i32>} : memref<8x2xf32, #tpu.memory_space<vmem>>, vector<8x2xf32>,
    return
  }
  func.func @transform_0(%arg0: i32) -> (i32, i32) {
    %c0_i32 = arith.constant 0 : i32
    %c0_i32_0 = arith.constant 0 : i32
    return %arg0, %c0_i32 : i32, i32
  }
  func.func @transform_1(%arg0: i32) -> (i32, i32) {
    %c0_i32 = arith.constant 0 : i32
    %c0_i32_0 = arith.constant 0 : i32
    %c0_i32_1 = arith.constant 0 : i32
    return %c0_i32, %c0_i32_0 : i32, i32
  }
  func.func @transform_2(%arg0: i32) -> (i32, i32) {
    %c0_i32 = arith.constant 0 : i32
    %c0_i32_0 = arith.constant 0 : i32
    %c0_i32_1 = arith.constant 0 : i32
    return %c0_i32, %c0_i32_0 : i32, i32
  }
  func.func @transform_3(%arg0: i32) -> (i32, i32) {
    %c0_i32 = arith.constant 0 : i32
    %c0_i32_0 = arith.constant 0 : i32
    %c0_i32_1 = arith.constant 0 : i32
    return %c0_i32, %c0_i32_0 : i32, i32
  }
  func.func @transform_4(%arg0: i32) -> (i32, i32) {
    %c0_i32 = arith.constant 0 : i32
    %c0_i32_0 = arith.constant 0 : i32
    %c0_i32_1 = arith.constant 0 : i32
    return %c0_i32, %c0_i32_0 : i32, i32
  }
  func.func @transform_5(%arg0: i32) -> (i32, i32) {
    %c0_i32 = arith.constant 0 : i32
    %c0_i32_0 = arith.constant 0 : i32
    return %arg0, %c0_i32 : i32, i32
  }
}

</mosaic_0001>

<llo_original>
// kernel: tpu_custom_call.1
$region0: #{tpu_custom_call.1}
  #allocation0 [shape = 'u32[]', space=smem, size = 0x4, offset = 0x4, fixed_abs, tag = 'smem constant byte address 0x4 - core index']
  #allocation1 [shape = 'u32[144,128]{1,0:T(1,128)}', space=vmem, size = 0x12000, scoped, tag = 'internal scratch']
  %s0 = inlined_call_operand.hbm [shape: f32[8,30], index: 0, kind: input, shape index: {}]
  %s1 = inlined_call_operand.hbm [shape: bf16[30,128], index: 1, kind: input, shape index: {}]
  %s2 = inlined_call_operand.vmem [shape: f32[1,128], index: 2, kind: input, shape index: {}]
  %s3 = inlined_call_operand.hbm [shape: bf16[128,128], index: 3, kind: input, shape index: {}]
  %s4 = inlined_call_operand.vmem [shape: f32[1,128], index: 4, kind: input, shape index: {}]
  %s5 = inlined_call_operand.vmem [shape: f32[8,2], index: 5, kind: output, shape index: {}]
  %s6 = sld [smem:[#allocation0]]
  $region42: #{tpu_custom_call.1} parent=0
    _
  %s8 = ssub.s32 1, %s6
  %s9 = scalar_select 0, %s8, %s6
  $region1: #{tpu_custom_call.1} parent=0
    #allocation2 [shape = 'u8[4096]{0}', space=vmem, size = 0x1000, scoped, tag = 'input window, operand 0, single buffered']
    #allocation3 [shape = 's32[1]{0}', space=sflag, size = 0x4, scoped, tag = 'scoped memory for tpu_custom_call.1']
    #allocation4 [shape = 'u8[8192]{0}', space=vmem, size = 0x2000, scoped, tag = 'input window, operand 1, single buffered']
    #allocation5 [shape = 's32[1]{0}', space=sflag, size = 0x4, scoped, tag = 'scoped memory for tpu_custom_call.1']
    #allocation6 [shape = 'u8[32768]{0}', space=vmem, size = 0x8000, scoped, tag = 'input window, operand 3, single buffered']
    %10 = vsyncpa [#allocation3], 0
    %11 = vsyncpa [#allocation5], 0
    // Predicated region
    $region2: #{tpu_custom_call.1} parent=1 // pred_check
      _
    $region3: #{tpu_custom_call.1} parent=1 // pred_check_branch
      %13 = sbr.rel (0) target = $region5
    $region4: #{tpu_custom_call.1} parent=1 // pred_region
      %s15 = ssub.s32 128, 128
      %16 = vsyncadd [#allocation3], %s15
      %s18 = sshll.u32 [#allocation2], 4
      %s19 = int_to_ptr.vmem [resolvable:$true] %s18
      %21 = dma.hbm_to_vmem [thread:$0]  %s0, 128, %s19, [#allocation3]
    $region5: #{tpu_custom_call.1} parent=1 // pred_fallthru
      _
    // Predicated region
    $region6: #{tpu_custom_call.1} parent=1 // pred_check
      _
    $region7: #{tpu_custom_call.1} parent=1 // pred_check_branch
      %23 = sbr.rel (0) target = $region9
    $region8: #{tpu_custom_call.1} parent=1 // pred_region
      %s25 = ssub.s32 256, 256
      %26 = vsyncadd [#allocation5], %s25
      %s27 = sshll.u32 [#allocation4], 4
      %s28 = int_to_ptr.vmem [resolvable:$true] %s27
      %33 = dma.hbm_to_vmem [thread:$0]  %s1, 256, %s28, [#allocation5], 64, 64, 4
    $region9: #{tpu_custom_call.1} parent=1 // pred_fallthru
      _
    // Predicated region
    $region10: #{tpu_custom_call.1} parent=1 // pred_check
      _
    $region11: #{tpu_custom_call.1} parent=1 // pred_check_branch
      %35 = sbr.rel (0) target = $region13
    $region12: #{tpu_custom_call.1} parent=1 // pred_region
      _
    $region13: #{tpu_custom_call.1} parent=1 // pred_fallthru
      _
    // Predicated region
    $region14: #{tpu_custom_call.1} parent=1 // pred_check
      _
    $region15: #{tpu_custom_call.1} parent=1 // pred_check_branch
      %37 = sbr.rel (0) target = $region17
    $region16: #{tpu_custom_call.1} parent=1 // pred_region
      %s39 = ssub.s32 1024, 1024
      %40 = vsyncadd [#allocation5], %s39
      %s41 = sshll.u32 [#allocation6], 4
      %s42 = int_to_ptr.vmem [resolvable:$true] %s41
      %47 = dma.hbm_to_vmem [thread:$0]  %s3, 1024, %s42, [#allocation5], 64, 64, 4
    $region17: #{tpu_custom_call.1} parent=1 // pred_fallthru
      _
    // Predicated region
    $region18: #{tpu_custom_call.1} parent=1 // pred_check
      _
    $region19: #{tpu_custom_call.1} parent=1 // pred_check_branch
      %49 = sbr.rel (0) target = $region21
    $region20: #{tpu_custom_call.1} parent=1 // pred_region
      _
    $region21: #{tpu_custom_call.1} parent=1 // pred_fallthru
      _
    // Predicated region
    $region22: #{tpu_custom_call.1} parent=1 // pred_check
      _
    $region23: #{tpu_custom_call.1} parent=1 // pred_check_branch
      %51 = sbr.rel (0) target = $region25
    $region24: #{tpu_custom_call.1} parent=1 // pred_region
      %52 = dma.done [#allocation3], 128
    $region25: #{tpu_custom_call.1} parent=1 // pred_fallthru
      _
    // Predicated region
    $region26: #{tpu_custom_call.1} parent=1 // pred_check
      _
    $region27: #{tpu_custom_call.1} parent=1 // pred_check_branch
      %54 = sbr.rel (0) target = $region29
    $region28: #{tpu_custom_call.1} parent=1 // pred_region
      %55 = dma.done [#allocation5], 256
    $region29: #{tpu_custom_call.1} parent=1 // pred_fallthru
      _
    // Predicated region
    $region30: #{tpu_custom_call.1} parent=1 // pred_check
      _
    $region31: #{tpu_custom_call.1} parent=1 // pred_check_branch
      %57 = sbr.rel (0) target = $region33
    $region32: #{tpu_custom_call.1} parent=1 // pred_region
      %58 = dma.done [#allocation5], 1024
    $region33: #{tpu_custom_call.1} parent=1 // pred_fallthru
      _
    %v60 = vld [vmem:[#allocation2] sm:$0xff]
    %v61 = vpack.c.bf16 %v60, %v60
    %v62 = vld [vmem:[#allocation4] sm:$0xf]
    %v63 = vld [vmem:[#allocation4 + $0x4] sm:$0xf]
    %v64 = vld [vmem:[#allocation4 + $0x8] sm:$0xf]
    %v65 = vld [vmem:[#allocation4 + $0xc] sm:$0x7]
    %v66 = vld [vmem:[%s2] sm:$0x1]
    %v68 = vlaneseq
    %v69 = vshrl.u32 %v68, 7
    %v70 = vsub.s32 0, %v69
    %v71 = vrot.slane %v66, %v70
    %v77 = vunpack.c.l.b16 %v62
    %v78 = vunpack.c.l.b16 %v63
    %v79 = vunpack.c.l.b16 %v64
    %v80 = vunpack.c.l.b16 %v65
    %v81 = vpack.c.b16 %v78, %v77
    %v82 = vpack.c.b16 %v80, %v79
    %vm84 = vcmask 244736
    %v86 = vsel %vm84, %v61, 0
    %vm88 = vcmask 1046528
    %v90 = vsel %vm88, %v82, 0
    %92 = vmatprep.subr.bf16.mxu0 0
    %93 = vmatpush1.bf16.msra.mxu0 0
    %94 = vmatprep.subr.bf16.mxu0 0
    %95 = vmatpush1.bf16.msra.mxu0 0
    %96 = vmatprep.subr.bf16.mxu0 0
    %97 = vmatpush1.bf16.msra.mxu0 0
    %98 = vmatprep.subr.bf16.mxu0 0
    %99 = vmatpush1.bf16.msra.mxu0 0
    %100 = vmatprep.subr.bf16.mxu0 0
    %101 = vmatpush1.bf16.msra.mxu0 0
    %102 = vmatprep.subr.bf16.mxu0 0
    %103 = vmatpush1.bf16.msra.mxu0 0
    %104 = vmatprep.subr.bf16.mxu0 0
    %105 = vmatpush1.bf16.msra.mxu0 %v90
    %106 = vmatprep.subr.bf16.mxu0 0
    %107 = vmatpush1.bf16.msra.mxu0 %v81
    %108 = vmatprep.subr.bf16.mxu0 0
    %109 = vmatpush2.bf16.msra.mxu0 0
    %110 = vmatprep.subr.bf16.mxu0 0
    %111 = vmatpush2.bf16.msra.mxu0 0
    %112 = vmatprep.subr.bf16.mxu0 0
    %113 = vmatpush2.bf16.msra.mxu0 0
    %114 = vmatprep.subr.bf16.mxu0 0
    %115 = vmatpush2.bf16.msra.mxu0 0
    %116 = vmatprep.subr.bf16.mxu0 0
    %117 = vmatpush2.bf16.msra.mxu0 0
    %118 = vmatprep.subr.bf16.mxu0 0
    %119 = vmatpush2.bf16.msra.mxu0 0
    %120 = vmatprep.subr.bf16.mxu0 0
    %121 = vmatpush2.bf16.msra.mxu0 0
    %122 = vmatprep.subr.bf16.mxu0 0
    %123 = vmatpush2.bf16.msra.mxu0 0
    %124 = vmatprep.mubr.bf16.mxu0 0
    %125 = vmatmul.mubr.bf16.gmra.mxu0 %v86
    %v126 = vpop.f32.mrf.mxu0
    %v127 = vadd.f32 %v71, %v126
    %v128 = vpop.f32.mrf.mxu0
    %v129 = vpop.f32.mrf.mxu0
    %v130 = vpop.f32.mrf.mxu0
    %131 = vdwg.mxu0
    %v132 = vmax.f32 %v127, 0.0
    %v133 = vpack.c.bf16 %v132, %v132
    %v134 = vld [vmem:[#allocation6] sm:$0xf]
    %v135 = vld [vmem:[#allocation6 + $0x4] sm:$0xf]
    %v136 = vld [vmem:[#allocation6 + $0x8] sm:$0xf]
    %v137 = vld [vmem:[#allocation6 + $0xc] sm:$0xf]
    %v138 = vld [vmem:[#allocation6 + $0x10] sm:$0xf]
    %v139 = vld [vmem:[#allocation6 + $0x14] sm:$0xf]
    %v140 = vld [vmem:[#allocation6 + $0x18] sm:$0xf]
    %v141 = vld [vmem:[#allocation6 + $0x1c] sm:$0xf]
    %v142 = vld [vmem:[#allocation6 + $0x20] sm:$0xf]
    %v143 = vld [vmem:[#allocation6 + $0x24] sm:$0xf]
    %v144 = vld [vmem:[#allocation6 + $0x28] sm:$0xf]
    %v145 = vld [vmem:[#allocation6 + $0x2c] sm:$0xf]
    %v146 = vld [vmem:[#allocation6 + $0x30] sm:$0xf]
    %v147 = vld [vmem:[#allocation6 + $0x34] sm:$0xf]
    %v148 = vld [vmem:[#allocation6 + $0x38] sm:$0xf]
    %v149 = vld [vmem:[#allocation6 + $0x3c] sm:$0xf]
    %v150 = vld [vmem:[%s4] sm:$0x1]
    %v152 = vlaneseq
    %v153 = vshrl.u32 %v152, 7
    %v154 = vsub.s32 0, %v153
    %v155 = vrot.slane %v150, %v154
    %v173 = vunpack.c.l.b16 %v134
    %v174 = vunpack.c.l.b16 %v135
    %v175 = vunpack.c.l.b16 %v136
    %v176 = vunpack.c.l.b16 %v137
    %v177 = vunpack.c.l.b16 %v138
    %v178 = vunpack.c.l.b16 %v139
    %v179 = vunpack.c.l.b16 %v140
    %v180 = vunpack.c.l.b16 %v141
    %v181 = vunpack.c.l.b16 %v142
    %v182 = vunpack.c.l.b16 %v143
    %v183 = vunpack.c.l.b16 %v144
    %v184 = vunpack.c.l.b16 %v145
    %v185 = vunpack.c.l.b16 %v146
    %v186 = vunpack.c.l.b16 %v147
    %v187 = vunpack.c.l.b16 %v148
    %v188 = vunpack.c.l.b16 %v149
    %v189 = vpack.c.b16 %v174, %v173
    %v190 = vpack.c.b16 %v176, %v175
    %v191 = vpack.c.b16 %v178, %v177
    %v192 = vpack.c.b16 %v180, %v179
    %v193 = vpack.c.b16 %v182, %v181
    %v194 = vpack.c.b16 %v184, %v183
    %v195 = vpack.c.b16 %v186, %v185
    %v196 = vpack.c.b16 %v188, %v187
    %205 = vmatprep.subr.bf16.mxu0 0
    %206 = vmatpush1.bf16.msra.mxu0 %v196
    %207 = vmatprep.subr.bf16.mxu0 0
    %208 = vmatpush1.bf16.msra.mxu0 %v195
    %209 = vmatprep.subr.bf16.mxu0 0
    %210 = vmatpush1.bf16.msra.mxu0 %v194
    %211 = vmatprep.subr.bf16.mxu0 0
    %212 = vmatpush1.bf16.msra.mxu0 %v193
    %213 = vmatprep.subr.bf16.mxu0 0
    %214 = vmatpush1.bf16.msra.mxu0 %v192
    %215 = vmatprep.subr.bf16.mxu0 0
    %216 = vmatpush1.bf16.msra.mxu0 %v191
    %217 = vmatprep.subr.bf16.mxu0 0
    %218 = vmatpush1.bf16.msra.mxu0 %v190
    %219 = vmatprep.subr.bf16.mxu0 0
    %220 = vmatpush1.bf16.msra.mxu0 %v189
    %221 = vmatprep.subr.bf16.mxu0 0
    %222 = vmatpush2.bf16.msra.mxu0 0
    %223 = vmatprep.subr.bf16.mxu0 0
    %224 = vmatpush2.bf16.msra.mxu0 0
    %225 = vmatprep.subr.bf16.mxu0 0
    %226 = vmatpush2.bf16.msra.mxu0 0
    %227 = vmatprep.subr.bf16.mxu0 0
    %228 = vmatpush2.bf16.msra.mxu0 0
    %229 = vmatprep.subr.bf16.mxu0 0
    %230 = vmatpush2.bf16.msra.mxu0 0
    %231 = vmatprep.subr.bf16.mxu0 0
    %232 = vmatpush2.bf16.msra.mxu0 0
    %233 = vmatprep.subr.bf16.mxu0 0
    %234 = vmatpush2.bf16.msra.mxu0 0
    %235 = vmatprep.subr.bf16.mxu0 0
    %236 = vmatpush2.bf16.msra.mxu0 0
    %237 = vmatprep.mubr.bf16.mxu0 0
    %238 = vmatmul.mubr.bf16.gmra.mxu0 %v133
    %v239 = vpop.f32.mrf.mxu0
    %v240 = vadd.f32 %v155, %v239
    %v241 = vpop.f32.mrf.mxu0
    %v242 = vpop.f32.mrf.mxu0
    %v243 = vpop.f32.mrf.mxu0
    %244 = vdwg.mxu0
    %vm245 = vcmask 15360
    %246 = vst.msk [vmem:[%s5] sm:$0xff] %vm245, %v240
    // Predicated region
    $region34: #{tpu_custom_call.1} parent=1 // pred_check
      _
    $region35: #{tpu_custom_call.1} parent=1 // pred_check_branch
      %248 = sbr.rel (0) target = $region37
    $region36: #{tpu_custom_call.1} parent=1 // pred_region
      _
    $region37: #{tpu_custom_call.1} parent=1 // pred_fallthru
      _
    // Predicated region
    $region38: #{tpu_custom_call.1} parent=1 // pred_check
      _
    $region39: #{tpu_custom_call.1} parent=1 // pred_check_branch
      %250 = sbr.rel (0) target = $region41
    $region40: #{tpu_custom_call.1} parent=1 // pred_region
      _
    $region41: #{tpu_custom_call.1} parent=1 // pred_fallthru
      _
    %251 = vsyncpa [#allocation3], 1
    %252 = vsyncpa [#allocation5], 1

</llo_original>
